<compile_context>
chip_gen: v7x
topology: tpu7x:2x2x1
jax: 0.10.0
libtpu: 0.0.40
codegen_flags: <defaults>
</compile_context>

<pallas_src>
import jax
import jax.numpy as jnp
from jax.experimental import pallas as pl
from jax.experimental.pallas import tpu as pltpu

_LANES = 128
# ~2 MiB per buffer.  BlockSpec double-buffers both input and output
# (~4 buffers live ~= 8 MiB), comfortably under the default scoped-VMEM limit
# on v5e (16 MiB), v6e (32 MiB) and v7x (32 MiB scoped / 64 MiB physical).
_DEFAULT_TILE_BYTES = 2 * 1024 * 1024


def _sublane_multiple(dtype) -> int:
    """Minimum second-to-last-dim tile multiple for this dtype.

    Sub-32-bit dtypes pack along sublanes: 8 rows for 4-byte dtypes,
    16 for 2-byte (bf16/fp16), 32 for 1-byte (int8/fp8).
    """
    itemsize = jnp.dtype(dtype).itemsize
    return 8 * max(1, 4 // itemsize)


# ---------------------------------------------------------------------------
# Path 1 (default kernel path): whole-tensor HBM->HBM DMA.
#   - exactly 1 HBM read + 1 HBM write, no VMEM staging, no tiling rules,
#     works for any shape / dtype, no per-generation VMEM sizing needed.
# ---------------------------------------------------------------------------
def _dma_copy_kernel(x_hbm, o_hbm, sem):
    cp = pltpu.make_async_copy(x_hbm, o_hbm, sem)
    cp.start()
    cp.wait()


def _identity_copy_dma(x):
    nbytes = x.size * jnp.dtype(x.dtype).itemsize
    # TODO(synk): for multi-GiB tensors, split into a few outstanding chunked
    # DMAs to engage multiple DMA engines; a single DMA is ample at module-
    # activation sizes.
    return pl.pallas_call(
        _dma_copy_kernel,
        out_shape=jax.ShapeDtypeStruct(x.shape, x.dtype),
        in_specs=[pl.BlockSpec(memory_space=pl.ANY)],
        out_specs=pl.BlockSpec(memory_space=pl.ANY),
        scratch_shapes=[pltpu.SemaphoreType.DMA(())],
        cost_estimate=pl.CostEstimate(
            flops=0, transcendentals=0, bytes_accessed=2 * nbytes),
    )(x)


# ---------------------------------------------------------------------------
# Path 2 (alternative): BlockSpec-pipelined VMEM-staged copy with large,
# lane-dense, bytes-sized tiles.  Falls back to the DMA path when the element
# count is not a multiple of 128 (rather than padding).
# ---------------------------------------------------------------------------
def _tile_copy_kernel(x_ref, o_ref):
    # Pure pass-through; the binding resource is DMA/HBM, not any VLIW slot.
    o_ref[...] = x_ref[...]


def _identity_copy_tiled(x, tile_bytes=_DEFAULT_TILE_BYTES):
    total = x.size
    itemsize = jnp.dtype(x.dtype).itemsize
    sub = _sublane_multiple(x.dtype)

    # Pick a lane-dense 2-D view (rows, cols).  This is an order-preserving
    # reshape of a contiguous buffer -> metadata-only, no extra HBM pass.
    if (x.ndim >= 2 and x.shape[-1] % _LANES == 0
            and x.shape[-1] * itemsize * sub <= tile_bytes):
        cols = x.shape[-1]          # natural trailing dim is already lane-dense
    elif total % _LANES == 0:
        cols = _LANES               # flat (rows, 128) view, still no pad
    else:
        # Non-lane-aligned element count: use the single-DMA path instead of
        # padding (padding would add two extra full HBM passes).
        return _identity_copy_dma(x)

    rows = total // cols
    row_bytes = cols * itemsize
    rows_per_tile = max(sub, (tile_bytes // row_bytes) // sub * sub)
    # Single block (== full row extent) for small tensors; otherwise a
    # sublane-aligned tile.  Pallas masks the partial last block if rows is
    # not an exact multiple of tile_rows, so no padding is ever needed.
    tile_rows = rows if rows <= rows_per_tile else rows_per_tile

    x2d = x.reshape(rows, cols)
    grid = (pl.cdiv(rows, tile_rows),)

    out2d = pl.pallas_call(
        _tile_copy_kernel,
        out_shape=jax.ShapeDtypeStruct((rows, cols), x.dtype),
        grid=grid,
        in_specs=[pl.BlockSpec((tile_rows, cols), lambda i: (i, 0))],
        out_specs=pl.BlockSpec((tile_rows, cols), lambda i: (i, 0)),
        # NOTE: no input_output_aliases -- x2d is (a view of) the caller's
        # non-donated argument; aliasing would force XLA to insert a defensive
        # full copy before the call (an extra HBM pass).
        compiler_params=pltpu.CompilerParams(
            # Independent row tiles.  On v7x (2 TensorCores) this axis could
            # use pltpu.CORE_PARALLEL to split the copy across both cores;
            # "parallel" is the portable choice for v5e/v6e as well.
            dimension_semantics=("parallel",)),
        cost_estimate=pl.CostEstimate(
            flops=0, transcendentals=0, bytes_accessed=2 * total * itemsize),
    )(x2d)
    return out2d.reshape(x.shape)


# ---------------------------------------------------------------------------
# PrintShape forward
# ---------------------------------------------------------------------------
def print_shape_forward(x, name="x", use_pallas=False, mode="dma"):
    """Pallas equivalent of PrintShape(name)(x): print the shape, return x.

    use_pallas=False (recommended): zero device work, exact identity.
    use_pallas=True : routes the tensor through an identity kernel
        mode="dma"   -> whole-tensor HBM->HBM DMA (default kernel path)
        mode="tiled" -> BlockSpec-pipelined VMEM copy with 2 MiB tiles
    """
    # Host-side print of the static shape, matching
    # `print(f'{self.name} shape: {x.shape}')`.  Under jit this fires at
    # trace time (once per compilation); use jax.debug.print for per-call
    # parity if needed.
    print(f"{name} shape: {tuple(x.shape)}")

    if not use_pallas:
        return x
    if x.ndim == 0 or x.size == 0:
        return x  # nothing worth a DMA
    if mode == "tiled":
        return _identity_copy_tiled(x)
    return _identity_copy_dma(x)


class PrintShape:
    """Thin functional mirror of the PyTorch nn.Module."""

    def __init__(self, name, use_pallas=False, mode="dma"):
        self.name = name
        self.use_pallas = use_pallas
        self.mode = mode

    def __call__(self, x):
        return print_shape_forward(x, self.name, self.use_pallas, self.mode)


if __name__ == "__main__":
    key = jax.random.PRNGKey(0)
    x = jax.random.normal(key, (2, 4, 16, 16), dtype=jnp.float32)  # NCHW

    # 1) Recommended fast path: no device work at all.
    y0 = jax.block_until_ready(PrintShape("feature_map")(x))
    assert y0.shape == x.shape and y0.dtype == x.dtype
    assert bool(jnp.all(y0 == x))

    # 2) Whole-tensor HBM->HBM DMA identity kernel.
    y1 = jax.block_until_ready(
        print_shape_forward(x, "feature_map", use_pallas=True, mode="dma"))
    assert y1.shape == x.shape and y1.dtype == x.dtype
    assert bool(jnp.all(y1 == x))

    # 3) Tiled, VMEM-pipelined identity copy (lane-dense flat view, no pad).
    y2 = jax.block_until_ready(
        print_shape_forward(x, "feature_map", use_pallas=True, mode="tiled"))
    assert y2.shape == x.shape and y2.dtype == x.dtype
    assert bool(jnp.all(y2 == x))

    # 4) bf16 tensor exercising the natural-trailing-dim (no reshape-to-128)
    #    path and the dtype-aware sublane rounding.
    xb = jax.random.normal(key, (2, 16, 256)).astype(jnp.bfloat16)
    yb = jax.block_until_ready(_identity_copy_tiled(xb))
    assert yb.shape == xb.shape and yb.dtype == xb.dtype
    assert bool(jnp.all(yb == xb))

    # 5) Multi-tile grid path (small tile budget to force several grid steps).
    xm = jax.random.normal(key, (4, 128, 128), dtype=jnp.float32)
    ym = jax.block_until_ready(_identity_copy_tiled(xm, tile_bytes=64 * 1024))
    assert ym.shape == xm.shape and bool(jnp.all(ym == xm))

    print("KERNEL_OK")
</pallas_src>

<mosaic_0001>
module attributes {stable_mosaic.version = 11 : i64} {
  func.func @_dma_copy_kernel(%arg0: memref<2x4x16x16xf32, #tpu.memory_space<any>>, %arg1: memref<2x4x16x16xf32, #tpu.memory_space<any>>, %arg2: memref<!tpu.dma_semaphore, #tpu.memory_space<semaphore_mem>>) attributes {dimension_semantics = [], scalar_prefetch = 0 : i64, scratch_operands = 1 : i64, tpu.core_type = #tpu.core_type<tc>} {
    tpu.enqueue_dma source(%arg0 : memref<2x4x16x16xf32, #tpu.memory_space<any>>) target(%arg1 : memref<2x4x16x16xf32, #tpu.memory_space<any>>) target_semaphore(%arg2 : memref<!tpu.dma_semaphore, #tpu.memory_space<semaphore_mem>>)
    tpu.wait_dma2 semaphore(%arg2 : memref<!tpu.dma_semaphore, #tpu.memory_space<semaphore_mem>>) src(%arg0 : memref<2x4x16x16xf32, #tpu.memory_space<any>>) dst(%arg1 : memref<2x4x16x16xf32, #tpu.memory_space<any>>)
    return
  }
}

</mosaic_0001>

<llo_original>
// kernel: tpu_custom_call.1
$region0: #{tpu_custom_call.1}
  #allocation0 [shape = 'u32[]', space=smem, size = 0x4, offset = 0x4, fixed_abs, tag = 'smem constant byte address 0x4 - core index']
  #allocation1 [shape = 'u32[144,128]{1,0:T(1,128)}', space=vmem, size = 0x12000, scoped, tag = 'internal scratch']
  #allocation2 [shape = 's32[1]{0}', space=sflag, size = 0x4, scoped, tag = 'scratch operand']
  #allocation3 [shape = 's32[]', space=sflag, size = 0x4, offset = 0, fixed_abs, tag = 'sflag constant byte address 0x0 - dummy sync flag']
  #allocation4 [shape = 'u32[0]{0}', space=smem, size = 0, offset = 0, fixed_abs, tag = 'smem constant byte address 0x0 - null']
  %s0 = inlined_call_operand.hbm [shape: f32[2,4,16,16], index: 0, kind: input, shape index: {}]
  %s1 = inlined_call_operand.hbm [shape: f32[2,4,16,16], index: 1, kind: output, shape index: {}]
  %s2 = sld [smem:[#allocation0]]
  $region2: #{tpu_custom_call.1} parent=0
    _
  %s4 = ssub.s32 1, %s2
  %s5 = scalar_select 0, %s4, %s2
  %s7 = sshll.u32 1, 14
  %s8 = sxor.u32 4294967295, %s7
  %s11 = sshll.u32 3, 24
  %s12 = sxor.u32 4294967295, %s11
  %s13 = sand.u32 0, %s12
  %s15 = sor.u32 %s13, 0
  %18 = dma.general %s0, 2048, %s1, [#allocation2], [#allocation3], [#allocation4], %s15, 0
  %s19 = smul.u32 2, 4
  %s20 = smul.u32 %s19, 16
  %s21 = smul.u32 %s20, 1
  %s22 = sshll.u32 %s21, 4
  %23 = dma.done [#allocation2], %s22
  %24 = vsyncmov [#allocation2]
  %s25 = vpop.sfrf %24
  %p26 = scmp.eq.s32.totalorder %s25, 0
  %p27 = pneg %p26
  %29 = shalt.err (%p27)

</llo_original>
